<compile_context>
chip_gen: v6e
topology: v6e:2x2x1
jax: 0.10.0
libtpu: 0.0.40
codegen_flags: <defaults>
</compile_context>

<pallas_src>
import functools

import jax
import jax.numpy as jnp
from jax.experimental import pallas as pl
from jax.experimental.pallas import tpu as pltpu

EPS = 1e-5


def _choose_pixel_tile(hwo, c_in2, c_out):
    """Pick the pixel tile TP (lane axis) and the padded per-sample pixel count.

    Per-grid-step VMEM footprint ~= 2 buffers x (input (c_in2, TP) + output
    (c_out, TP)) in f32.  Budget ~24 MiB keeps us under the 48 MiB scoped limit
    we request and well under v7x's 64 MiB physical VMEM.
    """
    bytes_per_px = 2 * (c_in2 + c_out) * 4
    budget = 24 * 1024 * 1024
    tp = min(8192, budget // bytes_per_px)
    tp = max(128, (tp // 128) * 128)
    if hwo <= tp:
        return hwo, hwo                      # single tile per sample, no padding
    hwo_pad = -(-hwo // tp) * tp
    return tp, hwo_pad


def _conv_stats_kernel(x_ref, w_ref, stats_ref, *, hwo, tp):
    """relu + fused 1x1 convs, then per-tile per-channel sum / centered 2nd moment.

    x_ref     : (1, 2*C_in, TP)   per-sample pixel tile (padded pixels are zero)
    w_ref     : (c_out, 2*C_in)   block-diagonal fused weight
    stats_ref : (1, 1, c_out, 2)  [..., 0]=sum, [..., 1]=sum((y-mean_tile)^2)
    """
    t = pl.program_id(1)
    cnt = jnp.minimum(tp, hwo - t * tp)                        # valid pixels in this tile
    cnt_f = cnt.astype(jnp.float32)

    xr = jnp.maximum(x_ref[0], 0.0)                            # (2*C_in, TP)
    y = jnp.dot(w_ref[...], xr, preferred_element_type=jnp.float32)   # (c_out, TP)

    s = jnp.sum(y, axis=1, keepdims=True)                      # (c_out, 1); pad pixels add 0
    mean = s / cnt_f
    lane = jax.lax.broadcasted_iota(jnp.int32, (1, tp), 1)
    mask = (lane < cnt).astype(jnp.float32)                    # zero out padded pixels
    dev = (y - mean) * mask
    m2 = jnp.sum(dev * dev, axis=1, keepdims=True)             # (c_out, 1)

    stats_ref[...] = jnp.concatenate([s, m2], axis=1)[None, None]


def _conv_norm_kernel(x_ref, w_ref, shift_ref, o_ref):
    """relu + fused 1x1 convs (BN scale pre-folded into w) + BN shift.

    Output block (1, c_out, TP) is lane-dense and maps straight into NCHW.
    """
    xr = jnp.maximum(x_ref[0], 0.0)                            # (2*C_in, TP)
    y = jnp.dot(w_ref[...], xr, preferred_element_type=jnp.float32)   # (c_out, TP)
    o_ref[0] = y + shift_ref[...]


def factorized_reduce(x, w1, w2):
    """
    x  : (N, C_in, H, W)   float32, NCHW (PyTorch convention), H and W even
    w1 : (C_out//2, C_in)  float32, 1x1 conv weight (OIHW squeezed)
    w2 : (C_out//2, C_in)  float32
    returns (N, C_out, H//2, W//2) float32, NCHW
    """
    N, C_in, H, W = x.shape
    co2 = w1.shape[0]
    c_out = 2 * co2
    assert H % 2 == 0 and W % 2 == 0, "H/W must be even (PyTorch cat would fail otherwise)"
    Ho, Wo = H // 2, W // 2
    HWo = Ho * Wo
    P = N * HWo
    c_in2 = 2 * C_in

    # ---- stride-2 phase select, kept per-sample (no N-transpose): one fused XLA gather.
    # TODO(synk): fold this select into the kernel input DMA (manual make_async_copy
    # row gather on NCHW x) to also drop this wrapper-side re-materialization.
    x1 = x[:, :, 0::2, 0::2]                       # conv1 pixels (N, C_in, Ho, Wo)
    x2 = x[:, :, 1::2, 1::2]                       # conv2 pixels (N, C_in, Ho, Wo)
    x12 = jnp.concatenate([x1, x2], axis=1).reshape(N, c_in2, HWo)

    TP, HWo_pad = _choose_pixel_tile(HWo, c_in2, c_out)
    if HWo_pad != HWo:
        # zero pixels -> relu 0 -> y 0; they are masked out of the statistics
        x12 = jnp.pad(x12, ((0, 0), (0, 0), (0, HWo_pad - HWo)))
    n_hw = HWo_pad // TP

    # ---- block-diagonal fused weight: y = W_blk @ relu([x1; x2]) == cat(conv1, conv2)
    w_blk = jnp.zeros((c_out, c_in2), jnp.float32)
    w_blk = w_blk.at[:co2, :C_in].set(w1)
    w_blk = w_blk.at[co2:, C_in:].set(w2)

    cparams = pltpu.CompilerParams(
        dimension_semantics=("parallel", "parallel"),
        vmem_limit_bytes=48 * 1024 * 1024,
    )

    # ---- pass 1: per-tile partial BN moments (fully parallel grid, megacore-friendly)
    stats = pl.pallas_call(
        functools.partial(_conv_stats_kernel, hwo=HWo, tp=TP),
        out_shape=jax.ShapeDtypeStruct((N, n_hw, c_out, 2), jnp.float32),
        grid=(N, n_hw),
        in_specs=[
            pl.BlockSpec((1, c_in2, TP), lambda n, t: (n, 0, t)),
            pl.BlockSpec((c_out, c_in2), lambda n, t: (0, 0)),
        ],
        out_specs=pl.BlockSpec((1, 1, c_out, 2), lambda n, t: (n, t, 0, 0)),
        compiler_params=cparams,
    )(x12, w_blk)

    # ---- tiny XLA combine: parallel-variance (Chan) formula, numerically stable
    sums = stats[:, :, :, 0].reshape(N * n_hw, c_out)
    m2s = stats[:, :, :, 1].reshape(N * n_hw, c_out)
    cnt_t = jnp.minimum(TP, HWo - jnp.arange(n_hw) * TP).astype(jnp.float32)   # (n_hw,)
    cnt_b = jnp.broadcast_to(cnt_t[None, :], (N, n_hw)).reshape(N * n_hw, 1)
    mean_b = sums / cnt_b
    mean = jnp.sum(sums, axis=0) / P
    m2 = jnp.sum(m2s, axis=0) + jnp.sum(cnt_b * (mean_b - mean[None, :]) ** 2, axis=0)
    var = m2 / P                                   # biased variance (training-mode BN)
    inv_std = jax.lax.rsqrt(var + EPS)

    # fold BN scale into the conv weight rows; only the shift is applied per tile
    w_scaled = w_blk * inv_std[:, None]
    shift = (-mean * inv_std).reshape(c_out, 1)

    # ---- pass 2: recompute the cheap conv + normalize, writing lane-dense blocks
    #      directly into an (N, c_out, Ho*Wo) slab (free reshape to NCHW, no transpose)
    out_cp = pl.pallas_call(
        _conv_norm_kernel,
        out_shape=jax.ShapeDtypeStruct((N, c_out, HWo_pad), jnp.float32),
        grid=(N, n_hw),
        in_specs=[
            pl.BlockSpec((1, c_in2, TP), lambda n, t: (n, 0, t)),
            pl.BlockSpec((c_out, c_in2), lambda n, t: (0, 0)),
            pl.BlockSpec((c_out, 1), lambda n, t: (0, 0)),
        ],
        out_specs=pl.BlockSpec((1, c_out, TP), lambda n, t: (n, 0, t)),
        compiler_params=cparams,
    )(x12, w_scaled, shift)

    if HWo_pad != HWo:
        out_cp = out_cp[:, :, :HWo]
    return out_cp.reshape(N, c_out, Ho, Wo)


def _reference(x, w1, w2):
    """Pure-JAX reference mirroring the PyTorch module (training-mode BN)."""
    xr = jnp.maximum(x, 0.0)
    w1_4d = w1[:, :, None, None]                  # OIHW
    w2_4d = w2[:, :, None, None]
    y1 = jax.lax.conv_general_dilated(xr, w1_4d, (2, 2), "VALID")
    y2 = jax.lax.conv_general_dilated(xr[:, :, 1:, 1:], w2_4d, (2, 2), "VALID")
    y = jnp.concatenate([y1, y2], axis=1)
    mean = y.mean(axis=(0, 2, 3), keepdims=True)
    var = ((y - mean) ** 2).mean(axis=(0, 2, 3), keepdims=True)
    return (y - mean) / jnp.sqrt(var + EPS)


if __name__ == "__main__":
    key = jax.random.PRNGKey(0)
    kx, k1, k2 = jax.random.split(key, 3)

    N, C_in, H, W = 2, 4, 16, 16
    C_out = 8

    x = jax.random.normal(kx, (N, C_in, H, W), dtype=jnp.float32)
    # Conv2d(C_in, C_out//2, 1, stride=2, bias=False) weight: (C_out//2, C_in, 1, 1)
    w1 = 0.5 * jax.random.normal(k1, (C_out // 2, C_in), dtype=jnp.float32)
    w2 = 0.5 * jax.random.normal(k2, (C_out // 2, C_in), dtype=jnp.float32)

    fact = jax.jit(factorized_reduce)
    out = fact(x, w1, w2)
    jax.block_until_ready(out)

    ref = _reference(x, w1, w2)
    assert out.shape == (N, C_out, H // 2, W // 2), out.shape
    assert jnp.allclose(out, ref, atol=1e-4, rtol=1e-4), "mismatch vs reference"

    print("KERNEL_OK")
</pallas_src>

<mosaic_0001>
module attributes {stable_mosaic.version = 11 : i64} {
  func.func @_conv_stats_kernel(%arg0: i32, %arg1: i32, %arg2: memref<1x8x64xf32, #tpu.memory_space<vmem>>, %arg3: memref<8x8xf32, #tpu.memory_space<vmem>>, %arg4: memref<1x1x8x2xf32, #tpu.memory_space<vmem>>) attributes {dimension_semantics = [#tpu.dimension_semantics<parallel>, #tpu.dimension_semantics<parallel>], iteration_bounds = array<i64: 2, 1>, scalar_prefetch = 0 : i64, scratch_operands = 0 : i64, tpu.core_type = #tpu.core_type<tc>, window_params = [{transform_indices = @transform_0, window_bounds = array<i64: 1, 8, 64>}, {pipeline_mode = #tpu.pipeline_mode<synchronous>, transform_indices = @transform_1, window_bounds = array<i64: 8, 8>}, {transform_indices = @transform_2, window_bounds = array<i64: 1, 1, 8, 2>}]} {
    %c64_i32 = arith.constant 64 : i32
    %0 = arith.muli %arg1, %c64_i32 : i32
    %c64_i32_0 = arith.constant 64 : i32
    %1 = arith.subi %c64_i32_0, %0 : i32
    %c64_i32_1 = arith.constant 64 : i32
    %2 = arith.minsi %c64_i32_1, %1 : i32
    %3 = arith.sitofp %2 : i32 to f32
    %c0 = arith.constant 0 : index
    %c0_2 = arith.constant 0 : index
    %c0_3 = arith.constant 0 : index
    %4 = vector.load %arg2[%c0, %c0_2, %c0_3] : memref<1x8x64xf32, #tpu.memory_space<vmem>>, vector<1x8x64xf32>
    %5 = vector.shape_cast %4 : vector<1x8x64xf32> to vector<8x64xf32>
    %cst = arith.constant 0.000000e+00 : f32
    %6 = vector.broadcast %cst : f32 to vector<8x64xf32>
    %7 = arith.maximumf %5, %6 : vector<8x64xf32>
    %c0_4 = arith.constant 0 : index
    %c0_5 = arith.constant 0 : index
    %8 = vector.load %arg3[%c0_4, %c0_5] : memref<8x8xf32, #tpu.memory_space<vmem>>, vector<8x8xf32>
    %cst_6 = arith.constant dense<0.000000e+00> : vector<8x64xf32>
    %9 = tpu.matmul %8, %7, %cst_6 {dimension_numbers = #tpu.dot_dimension_numbers<[1], [0], [0], [1], [0, 0, 1, 1], [], []>} : vector<8x8xf32>, vector<8x64xf32>, vector<8x64xf32> -> vector<8x64xf32>
    %cst_7 = arith.constant dense<0.000000e+00> : vector<8xf32>
    %10 = vector.multi_reduction <add>, %9, %cst_7 [1] : vector<8x64xf32> to vector<8xf32>
    %11 = vector.shape_cast %10 : vector<8xf32> to vector<8x1xf32>
    %12 = vector.broadcast %3 : f32 to vector<8x1xf32>
    %13 = arith.divf %11, %12 : vector<8x1xf32>
    %14 = tpu.iota {dimensions = array<i32: 1>} : vector<1x64xi32>
    %15 = vector.broadcast %2 : i32 to vector<1x64xi32>
    %16 = arith.cmpi slt, %14, %15 : vector<1x64xi32>
    %17 = arith.extui %16 : vector<1x64xi1> to vector<1x64xi32>
    %18 = arith.sitofp %17 : vector<1x64xi32> to vector<1x64xf32>
    %19 = vector.broadcast %13 : vector<8x1xf32> to vector<8x64xf32>
    %20 = arith.subf %9, %19 : vector<8x64xf32>
    %21 = vector.broadcast %18 : vector<1x64xf32> to vector<8x64xf32>
    %22 = arith.mulf %20, %21 : vector<8x64xf32>
    %23 = arith.mulf %22, %22 : vector<8x64xf32>
    %cst_8 = arith.constant dense<0.000000e+00> : vector<8xf32>
    %24 = vector.multi_reduction <add>, %23, %cst_8 [1] : vector<8x64xf32> to vector<8xf32>
    %25 = vector.shape_cast %24 : vector<8xf32> to vector<8x1xf32>
    %26 = tpu.concatenate %11, %25 in 1 : vector<8x1xf32>, vector<8x1xf32> -> vector<8x2xf32>
    %27 = vector.shape_cast %26 : vector<8x2xf32> to vector<1x1x8x2xf32>
    %c0_9 = arith.constant 0 : index
    %c0_10 = arith.constant 0 : index
    %c0_11 = arith.constant 0 : index
    %c0_12 = arith.constant 0 : index
    %28 = vector.load %arg4[%c0_9, %c0_10, %c0_11, %c0_12] : memref<1x1x8x2xf32, #tpu.memory_space<vmem>>, vector<1x1x8x2xf32>
    tpu.vector_store %arg4[%c0_9, %c0_10, %c0_11, %c0_12], %27 {strides = array<i32>} : memref<1x1x8x2xf32, #tpu.memory_space<vmem>>, vector<1x1x8x2xf32>,
    return
  }
  func.func @transform_0(%arg0: i32, %arg1: i32) -> (i32, i32, i32) {
    %c0_i32 = arith.constant 0 : i32
    %c0_i32_0 = arith.constant 0 : i32
    return %arg0, %c0_i32, %arg1 : i32, i32, i32
  }
  func.func @transform_1(%arg0: i32, %arg1: i32) -> (i32, i32) {
    %c0_i32 = arith.constant 0 : i32
    %c0_i32_0 = arith.constant 0 : i32
    %c0_i32_1 = arith.constant 0 : i32
    return %c0_i32, %c0_i32_0 : i32, i32
  }
  func.func @transform_2(%arg0: i32, %arg1: i32) -> (i32, i32, i32, i32) {
    %c0_i32 = arith.constant 0 : i32
    %c0_i32_0 = arith.constant 0 : i32
    %c0_i32_1 = arith.constant 0 : i32
    return %arg0, %arg1, %c0_i32, %c0_i32_0 : i32, i32, i32, i32
  }
}

module attributes {stable_mosaic.version = 11 : i64} {
  func.func @_conv_norm_kernel(%arg0: i32, %arg1: i32, %arg2: memref<1x8x64xf32, #tpu.memory_space<vmem>>, %arg3: memref<8x8xf32, #tpu.memory_space<vmem>>, %arg4: memref<8x1xf32, #tpu.memory_space<vmem>>, %arg5: memref<1x8x64xf32, #tpu.memory_space<vmem>>) attributes {dimension_semantics = [#tpu.dimension_semantics<parallel>, #tpu.dimension_semantics<parallel>], iteration_bounds = array<i64: 2, 1>, scalar_prefetch = 0 : i64, scratch_operands = 0 : i64, tpu.core_type = #tpu.core_type<tc>, window_params = [{transform_indices = @transform_0, window_bounds = array<i64: 1, 8, 64>}, {pipeline_mode = #tpu.pipeline_mode<synchronous>, transform_indices = @transform_1, window_bounds = array<i64: 8, 8>}, {pipeline_mode = #tpu.pipeline_mode<synchronous>, transform_indices = @transform_2, window_bounds = array<i64: 8, 1>}, {transform_indices = @transform_3, window_bounds = array<i64: 1, 8, 64>}]} {
    %c0 = arith.constant 0 : index
    %c0_0 = arith.constant 0 : index
    %c0_1 = arith.constant 0 : index
    %0 = vector.load %arg2[%c0, %c0_0, %c0_1] : memref<1x8x64xf32, #tpu.memory_space<vmem>>, vector<1x8x64xf32>
    %1 = vector.shape_cast %0 : vector<1x8x64xf32> to vector<8x64xf32>
    %cst = arith.constant 0.000000e+00 : f32
    %2 = vector.broadcast %cst : f32 to vector<8x64xf32>
    %3 = arith.maximumf %1, %2 : vector<8x64xf32>
    %c0_2 = arith.constant 0 : index
    %c0_3 = arith.constant 0 : index
    %4 = vector.load %arg3[%c0_2, %c0_3] : memref<8x8xf32, #tpu.memory_space<vmem>>, vector<8x8xf32>
    %cst_4 = arith.constant dense<0.000000e+00> : vector<8x64xf32>
    %5 = tpu.matmul %4, %3, %cst_4 {dimension_numbers = #tpu.dot_dimension_numbers<[1], [0], [0], [1], [0, 0, 1, 1], [], []>} : vector<8x8xf32>, vector<8x64xf32>, vector<8x64xf32> -> vector<8x64xf32>
    %c0_5 = arith.constant 0 : index
    %c0_6 = arith.constant 0 : index
    %6 = vector.load %arg4[%c0_5, %c0_6] : memref<8x1xf32, #tpu.memory_space<vmem>>, vector<8x1xf32>
    %7 = vector.broadcast %6 : vector<8x1xf32> to vector<8x64xf32>
    %8 = arith.addf %5, %7 : vector<8x64xf32>
    %c0_7 = arith.constant 0 : index
    %c0_8 = arith.constant 0 : index
    %c0_9 = arith.constant 0 : index
    %9 = vector.load %arg5[%c0_7, %c0_8, %c0_9] : memref<1x8x64xf32, #tpu.memory_space<vmem>>, vector<1x8x64xf32>
    %10 = vector.shape_cast %9 : vector<1x8x64xf32> to vector<8x64xf32>
    %11 = vector.shape_cast %8 : vector<8x64xf32> to vector<1x8x64xf32>
    tpu.vector_store %arg5[%c0_7, %c0_8, %c0_9], %11 {strides = array<i32>} : memref<1x8x64xf32, #tpu.memory_space<vmem>>, vector<1x8x64xf32>,
    return
  }
  func.func @transform_0(%arg0: i32, %arg1: i32) -> (i32, i32, i32) {
    %c0_i32 = arith.constant 0 : i32
    %c0_i32_0 = arith.constant 0 : i32
    return %arg0, %c0_i32, %arg1 : i32, i32, i32
  }
  func.func @transform_1(%arg0: i32, %arg1: i32) -> (i32, i32) {
    %c0_i32 = arith.constant 0 : i32
    %c0_i32_0 = arith.constant 0 : i32
    %c0_i32_1 = arith.constant 0 : i32
    return %c0_i32, %c0_i32_0 : i32, i32
  }
  func.func @transform_2(%arg0: i32, %arg1: i32) -> (i32, i32) {
    %c0_i32 = arith.constant 0 : i32
    %c0_i32_0 = arith.constant 0 : i32
    %c0_i32_1 = arith.constant 0 : i32
    return %c0_i32, %c0_i32_0 : i32, i32
  }
  func.func @transform_3(%arg0: i32, %arg1: i32) -> (i32, i32, i32) {
    %c0_i32 = arith.constant 0 : i32
    %c0_i32_0 = arith.constant 0 : i32
    return %arg0, %c0_i32, %arg1 : i32, i32, i32
  }
}

</mosaic_0001>

<llo_original>
// kernel: factorized_reduce.2
$region0: #{factorized_reduce.2}
  #allocation0 [shape = 'u32[]', space=smem, size = 0x4, offset = 0x4, fixed_abs, tag = 'smem constant byte address 0x4 - core index']
  #allocation1 [shape = 'u32[144,128]{1,0:T(1,128)}', space=vmem, size = 0x12000, scoped, tag = 'internal scratch']
  %s0 = inlined_call_operand.vmem [shape: f32[2,8,64], index: 0, kind: input, shape index: {}]
  %s1 = inlined_call_operand.vmem [shape: f32[8,8], index: 1, kind: input, shape index: {}]
  %s2 = inlined_call_operand.vmem [shape: f32[2,1,8,2], index: 2, kind: output, shape index: {}]
  %s3 = sld [smem:[#allocation0]]
  $region41: #{factorized_reduce.2} parent=0
    _
  %s5 = ssub.s32 1, %s3
  %s6 = scalar_select 0, %s5, %s3
  loop: start=0, step=1, limit=4
  $region2: #{factorized_reduce.2} parent=0 // loop_pre_header
    _
  $region3: #{factorized_reduce.2} parent=0 // loop_header
    %s8 = sphi 0, %s12
    %p9 = scmp.ge.s32.totalorder %s8, 4
    %s15 = sphi 0, %s27
    %s16 = sphi 0, %s23
    %s17 = sphi 0, %s15
    %s18 = sphi 0, %s16
    %s19 = sphi 0, %s17
    %s20 = sphi 0, %s18
    %s32 = sphi 0, %s34
    %s35 = sphi 0, %s32
    %s36 = sphi 0, %s35
    %s52 = sphi 0, %s36
    %s56 = sphi 0, %s56
    %s58 = sphi 0, %s56
    %s59 = sphi 0, %s58
    %s73 = sphi 0, %s59
    %s81 = sphi 0, %s83
    %s84 = sphi 0, %s81
    %s85 = sphi 0, %s84
    %s101 = sphi 0, %s85
  $region4: #{factorized_reduce.2} parent=0 // loop_header_branch
    %11 = sbr.rel (%p9) target = $region8
  $region5: #{factorized_reduce.2} parent=0 // loop_body
    %s13 = ssub.s32 %s8, 1
    %s14 = ssub.s32 %s8, 2
    %s21 = sadd.s32 1, %s16
    %p22 = scmp.ge.s32.totalorder %s21, 1
    %s23 = scalar_select %p22, 0, %s21
    %s24 = sadd.s32 1, %s15
    %s25 = scalar_select %p22, %s24, %s15
    %p26 = scmp.ge.s32.totalorder %s25, 2
    %s27 = scalar_select %p26, 0, %s25
    %s28 = ssub.s32 %s15, %s27
    %s29 = ssub.s32 %s16, %s23
    %s30 = sor.u32 %s28, %s29
    %p31 = scmp.eq.s32.totalorder %s30, 0
    %s33 = sadd.s32 %s32, 1
    %s34 = scalar_select %p31, %s32, %s33
    %p37 = pneg %p31
    %p38 = scmp.eq.s32.totalorder %s8, 1
    %p39 = por %p37, %p38
    %p40 = scmp.ne.s32.totalorder %s32, %s35
    %p41 = scmp.eq.s32.totalorder %s8, 0
    %p42 = por %p40, %p41
    %p43 = scmp.ne.s32.totalorder %s32, %s35
    %p44 = scmp.eq.s32.totalorder %s13, 1
    %p45 = por %p43, %p44
    %p46 = scmp.ne.s32.totalorder %s35, %s36
    %p47 = scmp.eq.s32.totalorder %s13, 0
    %p48 = por %p46, %p47
    %p49 = scmp.ne.s32.totalorder %s35, %s36
    %p50 = scmp.eq.s32.totalorder %s14, 1
    %p51 = por %p49, %p50
    %p53 = scmp.ne.s32.totalorder %s36, %s52
    %p54 = scmp.eq.s32.totalorder %s14, 0
    %p55 = por %p53, %p54
    %s57 = sadd.s32 %s56, 1
    %p60 = scmp.eq.s32.totalorder %s8, 1
    %p61 = scmp.ne.s32.totalorder %s56, %s58
    %p62 = scmp.eq.s32.totalorder %s8, 0
    %p63 = por %p61, %p62
    %p64 = scmp.ne.s32.totalorder %s56, %s58
    %p65 = scmp.eq.s32.totalorder %s13, 1
    %p66 = por %p64, %p65
    %p67 = scmp.ne.s32.totalorder %s58, %s59
    %p68 = scmp.eq.s32.totalorder %s13, 0
    %p69 = por %p67, %p68
    %p70 = scmp.ne.s32.totalorder %s58, %s59
    %p71 = scmp.eq.s32.totalorder %s14, 1
    %p72 = por %p70, %p71
    %p74 = scmp.ne.s32.totalorder %s59, %s73
    %p75 = scmp.eq.s32.totalorder %s14, 0
    %p76 = por %p74, %p75
    %s77 = ssub.s32 %s15, %s27
    %s78 = ssub.s32 %s16, %s23
    %s79 = sor.u32 %s77, %s78
    %p80 = scmp.eq.s32.totalorder %s79, 0
    %s82 = sadd.s32 %s81, 1
    %s83 = scalar_select %p80, %s81, %s82
    %p86 = pneg %p80
    %p87 = scmp.eq.s32.totalorder %s8, 1
    %p88 = por %p86, %p87
    %p89 = scmp.ne.s32.totalorder %s81, %s84
    %p90 = scmp.eq.s32.totalorder %s8, 0
    %p91 = por %p89, %p90
    %p92 = scmp.ne.s32.totalorder %s81, %s84
    %p93 = scmp.eq.s32.totalorder %s13, 1
    %p94 = por %p92, %p93
    %p95 = scmp.ne.s32.totalorder %s84, %s85
    %p96 = scmp.eq.s32.totalorder %s13, 0
    %p97 = por %p95, %p96
    %p98 = scmp.ne.s32.totalorder %s84, %s85
    %p99 = scmp.eq.s32.totalorder %s14, 1
    %p100 = por %p98, %p99
    %p102 = scmp.ne.s32.totalorder %s85, %s101
    %p103 = scmp.eq.s32.totalorder %s14, 0
    %p104 = por %p102, %p103
    %p105 = scmp.le.s32.totalorder 1, %s8
    %p106 = scmp.lt.s32.totalorder %s8, 3
    %p107 = pnand %p105, %p106
    %p108 = pneg %p107
    // Predicated region
    $region9: #{factorized_reduce.2} parent=5 // pred_check
      _
    $region10: #{factorized_reduce.2} parent=5 // pred_check_branch
      %110 = sbr.rel (%p107) target = $region12
    $region11: #{factorized_reduce.2} parent=5 // pred_region
      %s111 = ssub.s32 %s8, 1
      // Predicated region
      $region13: #{factorized_reduce.2} parent=11 // pred_check
        %p112 = pneg %p69
      $region14: #{factorized_reduce.2} parent=11 // pred_check_branch
        %114 = sbr.rel (%p112) target = $region16
      $region15: #{factorized_reduce.2} parent=11 // pred_region
        _
      $region16: #{factorized_reduce.2} parent=11 // pred_fallthru
        _
    $region12: #{factorized_reduce.2} parent=5 // pred_fallthru
      _
    %p115 = scmp.lt.s32.totalorder %s8, 2
    // Predicated region
    $region17: #{factorized_reduce.2} parent=5 // pred_check
      %p116 = pneg %p115
    $region18: #{factorized_reduce.2} parent=5 // pred_check_branch
      %118 = sbr.rel (%p116) target = $region20
    $region19: #{factorized_reduce.2} parent=5 // pred_region
      // Predicated region
      $region21: #{factorized_reduce.2} parent=19 // pred_check
        %p119 = pneg %p42
      $region22: #{factorized_reduce.2} parent=19 // pred_check_branch
        %121 = sbr.rel (%p119) target = $region24
      $region23: #{factorized_reduce.2} parent=19 // pred_region
        %p122 = scmp.lt.s32.totalorder %s15, 1
        %s123 = scalar_select %p122, %s15, 1
        %p124 = scmp.lt.s32.totalorder %s16, 0
        %s125 = scalar_select %p124, %s16, 0
        %s126 = sadd.s32 %s125, %s123
        %s127 = smul.addr %s126, 8
        %s128 = scalar_lea.vmem %s0, %s127
      $region24: #{factorized_reduce.2} parent=19 // pred_fallthru
        _
    $region20: #{factorized_reduce.2} parent=5 // pred_fallthru
      _
    %p129 = scmp.le.s32.totalorder 1, %s8
    %p130 = scmp.lt.s32.totalorder %s8, 3
    %p131 = pnand %p129, %p130
    %p132 = pneg %p131
    // Predicated region
    $region25: #{factorized_reduce.2} parent=5 // pred_check
      _
    $region26: #{factorized_reduce.2} parent=5 // pred_check_branch
      %134 = sbr.rel (%p131) target = $region28
    $region27: #{factorized_reduce.2} parent=5 // pred_region
      %s135 = ssub.s32 %s8, 1
      %p136 = scmp.lt.s32.totalorder %s17, 1
      %s137 = scalar_select %p136, %s17, 1
      %p138 = scmp.lt.s32.totalorder %s18, 0
      %s139 = scalar_select %p138, %s18, 0
      %s140 = sadd.s32 %s139, %s137
      %s141 = smul.addr %s140, 8
      %s142 = scalar_lea.vmem %s0, %s141
      %p143 = pneg %p48
      %p144 = pneg %p45
      %p145 = pneg %p69
      %p146 = pneg %p66
      %p147 = pneg %p97
      %p148 = pneg %p94
      %p149 = scmp.lt.s32.totalorder %s17, 1
      %s150 = scalar_select %p149, %s17, 1
      %p151 = scmp.lt.s32.totalorder %s18, 0
      %s152 = scalar_select %p151, %s18, 0
      %s153 = sadd.s32 %s152, %s150
      %s154 = smul.addr %s153, 8
      %s155 = scalar_lea.vmem %s2, %s154
      %p156 = scmp.lt.s32.totalorder %s17, 1
      %s157 = scalar_select %p156, %s17, 1
      %p158 = scmp.lt.s32.totalorder %s18, 0
      %s159 = scalar_select %p158, %s18, 0
      %s160 = sadd.s32 %s159, %s157
      %s161 = smul.addr %s160, 8
      %s162 = scalar_lea.vmem %s0, %s161
      %p163 = scmp.lt.s32.totalorder %s17, 1
      %s164 = scalar_select %p163, %s17, 1
      %p165 = scmp.lt.s32.totalorder %s18, 0
      %s166 = scalar_select %p165, %s18, 0
      %s167 = sadd.s32 %s166, %s164
      %s168 = smul.addr %s167, 8
      %s169 = scalar_lea.vmem %s2, %s168
      %s170 = smul.u32 %s18, 64
      %s171 = ssub.s32 64, %s170
      %p172 = scmp.lt.s32.totalorder %s171, 64
      %s173 = scalar_select %p172, %s171, 64
      %s174 = scvt.s32.f32 %s173
      %v175 = vld [vmem:[%s162] sm:$0xff]
      %v176 = vmax.f32 %v175, 0.0
      %v177 = vld [vmem:[%s1] sm:$0xff]
      %vm178 = vcmask 64512
      %v180 = vsel %vm178, %v177, 0
      %182 = vmatprep.subr.mxu0 0.0
      %183 = vmatpush1.msra.mxu0 0.0
      %184 = vmatprep.subr.mxu0 0.0
      %185 = vmatpush1.msra.mxu0 0.0
      %186 = vmatprep.subr.mxu0 0.0
      %187 = vmatpush1.msra.mxu0 0.0
      %188 = vmatprep.subr.mxu0 0.0
      %189 = vmatpush1.msra.mxu0 0.0
      %190 = vmatprep.subr.mxu0 0.0
      %191 = vmatpush1.msra.mxu0 0.0
      %192 = vmatprep.subr.mxu0 0.0
      %193 = vmatpush1.msra.mxu0 0.0
      %194 = vmatprep.subr.mxu0 0.0
      %195 = vmatpush1.msra.mxu0 0.0
      %196 = vmatprep.subr.mxu0 0.0
      %197 = vmatpush1.msra.mxu0 0.0
      %198 = vmatprep.subr.mxu0 0.0
      %199 = vmatpush1.msra.mxu0 0.0
      %200 = vmatprep.subr.mxu0 0.0
      %201 = vmatpush1.msra.mxu0 0.0
      %202 = vmatprep.subr.mxu0 0.0
      %203 = vmatpush1.msra.mxu0 0.0
      %204 = vmatprep.subr.mxu0 0.0
      %205 = vmatpush1.msra.mxu0 0.0
      %206 = vmatprep.subr.mxu0 0.0
      %207 = vmatpush1.msra.mxu0 0.0
      %208 = vmatprep.subr.mxu0 0.0
      %209 = vmatpush1.msra.mxu0 0.0
      %210 = vmatprep.subr.mxu0 0.0
      %211 = vmatpush1.msra.mxu0 0.0
      %212 = vmatprep.subr.mxu0 0.0
      %213 = vmatpush1.msra.mxu0 %v176
      %214 = vmatprep.subr.mxu0 0.0
      %215 = vmatpush2.msra.mxu0 0.0
      %216 = vmatprep.subr.mxu0 0.0
      %217 = vmatpush2.msra.mxu0 0.0
      %218 = vmatprep.subr.mxu0 0.0
      %219 = vmatpush2.msra.mxu0 0.0
      %220 = vmatprep.subr.mxu0 0.0
      %221 = vmatpush2.msra.mxu0 0.0
      %222 = vmatprep.subr.mxu0 0.0
      %223 = vmatpush2.msra.mxu0 0.0
      %224 = vmatprep.subr.mxu0 0.0
      %225 = vmatpush2.msra.mxu0 0.0
      %226 = vmatprep.subr.mxu0 0.0
      %227 = vmatpush2.msra.mxu0 0.0
      %228 = vmatprep.subr.mxu0 0.0
      %229 = vmatpush2.msra.mxu0 0.0
      %230 = vmatprep.subr.mxu0 0.0
      %231 = vmatpush2.msra.mxu0 0.0
      %232 = vmatprep.subr.mxu0 0.0
      %233 = vmatpush2.msra.mxu0 0.0
      %234 = vmatprep.subr.mxu0 0.0
      %235 = vmatpush2.msra.mxu0 0.0
      %236 = vmatprep.subr.mxu0 0.0
      %237 = vmatpush2.msra.mxu0 0.0
      %238 = vmatprep.subr.mxu0 0.0
      %239 = vmatpush2.msra.mxu0 0.0
      %240 = vmatprep.subr.mxu0 0.0
      %241 = vmatpush2.msra.mxu0 0.0
      %242 = vmatprep.subr.mxu0 0.0
      %243 = vmatpush2.msra.mxu0 0.0
      %244 = vmatprep.subr.mxu0 0.0
      %245 = vmatpush2.msra.mxu0 0.0
      %246 = vmatprep.mubr.f32.mxu0 0.0
      %247 = vmatmul.mubr.f32.gmra.mxu0 %v180
      %v248 = vpop.f32.mrf.mxu0
      %v249 = vadd.f32 0.0, %v248
      %v250 = vpop.f32.mrf.mxu0
      %251 = vdwg.mxu0
      %vm252 = vcmask 523264
      %v253 = vsel %vm252, %v249, 0.0
      %254 = vadd.xlane.f32.xlu0 %v253
      %v255 = vpop.xlane.xlu0 %254
      %v256 = vstv %s174
      %v257 = vrcp.pop %v256
      %v258 = vmul.f32 %v255, %v257
      %v259 = vlaneseq
      %v260 = vand.u32 %v259, 127
      %v261 = vstv %s173
      %vm262 = vcmp.lt.s32.totalorder %v260, %v261
      %v263 = vsel %vm262, 1, 0
      %v264 = vcvt.s32.f32 %v263
      %v265 = vsub.f32 %v249, %v258
      %v266 = vmul.f32 %v265, %v264
      %v267 = vmul.f32 %v266, %v266
      %v268 = vsel %vm252, %v267, 0.0
      %269 = vadd.xlane.f32.xlu0 %v268
      %v270 = vpop.xlane.xlu0 %269
      %vm271 = vcmask 7168
      %v272 = vsel %vm271, %v255, %v270
      %vm273 = vcmask 15360
      %274 = vst.msk [vmem:[%s169] sm:$0xff] %vm273, %v272
      %p275 = scmp.lt.s32.totalorder %s17, 1
      %s276 = scalar_select %p275, %s17, 1
      %p277 = scmp.lt.s32.totalorder %s18, 0
      %s278 = scalar_select %p277, %s18, 0
      %s279 = sadd.s32 %s278, %s276
      %s280 = smul.addr %s279, 8
      %s281 = scalar_lea.vmem %s2, %s280
      // Predicated region
      $region29: #{factorized_reduce.2} parent=27 // pred_check
        %p282 = pneg %p94
      $region30: #{factorized_reduce.2} parent=27 // pred_check_branch
        %284 = sbr.rel (%p282) target = $region32
      $region31: #{factorized_reduce.2} parent=27 // pred_region
        _
      $region32: #{factorized_reduce.2} parent=27 // pred_fallthru
        _
    $region28: #{factorized_reduce.2} parent=5 // pred_fallthru
      _
    %p285 = scmp.le.s32.totalorder 2, %s8
    // Predicated region
    $region33: #{factorized_reduce.2} parent=5 // pred_check
      %p286 = pneg %p285
    $region34: #{factorized_reduce.2} parent=5 // pred_check_branch
      %288 = sbr.rel (%p286) target = $region36
    $region35: #{factorized_reduce.2} parent=5 // pred_region
      %s289 = ssub.s32 %s8, 2
      // Predicated region
      $region37: #{factorized_reduce.2} parent=35 // pred_check
        %p290 = pneg %p100
      $region38: #{factorized_reduce.2} parent=35 // pred_check_branch
        %292 = sbr.rel (%p290) target = $region40
      $region39: #{factorized_reduce.2} parent=35 // pred_region
        %p293 = scmp.lt.s32.totalorder %s19, 1
        %s294 = scalar_select %p293, %s19, 1
        %p295 = scmp.lt.s32.totalorder %s20, 0
        %s296 = scalar_select %p295, %s20, 0
        %s297 = sadd.s32 %s296, %s294
        %s298 = smul.addr %s297, 8
        %s299 = scalar_lea.vmem %s2, %s298
      $region40: #{factorized_reduce.2} parent=35 // pred_fallthru
        _
    $region36: #{factorized_reduce.2} parent=5 // pred_fallthru
      _
  $region6: #{factorized_reduce.2} parent=0 // loop_footer
    %s12 = sadd.s32 1, %s8
  $region7: #{factorized_reduce.2} parent=0 // loop_footer_branch
    %7 = sbr.rel target = $region3
  $region8: #{factorized_reduce.2} parent=0 // loop_exit
    _

// kernel: factorized_reduce.3
$region0: #{factorized_reduce.3}
  #allocation0 [shape = 'u32[]', space=smem, size = 0x4, offset = 0x4, fixed_abs, tag = 'smem constant byte address 0x4 - core index']
  #allocation1 [shape = 'u32[144,128]{1,0:T(1,128)}', space=vmem, size = 0x12000, scoped, tag = 'internal scratch']
  %s0 = inlined_call_operand.vmem [shape: f32[2,8,64], index: 0, kind: input, shape index: {}]
  %s1 = inlined_call_operand.vmem [shape: f32[8,8], index: 1, kind: input, shape index: {}]
  %s2 = inlined_call_operand.vmem [shape: f32[8,1], index: 2, kind: input, shape index: {}]
  %s3 = inlined_call_operand.vmem [shape: f32[2,8,64], index: 3, kind: output, shape index: {}]
  %s4 = sld [smem:[#allocation0]]
  $region45: #{factorized_reduce.3} parent=0
    _
  %s6 = ssub.s32 1, %s4
  %s7 = scalar_select 0, %s6, %s4
  loop: start=0, step=1, limit=4
  $region2: #{factorized_reduce.3} parent=0 // loop_pre_header
    _
  $region3: #{factorized_reduce.3} parent=0 // loop_header
    %s9 = sphi 0, %s13
    %p10 = scmp.ge.s32.totalorder %s9, 4
    %s16 = sphi 0, %s28
    %s17 = sphi 0, %s24
    %s18 = sphi 0, %s16
    %s19 = sphi 0, %s17
    %s20 = sphi 0, %s18
    %s21 = sphi 0, %s19
    %s33 = sphi 0, %s35
    %s36 = sphi 0, %s33
    %s37 = sphi 0, %s36
    %s53 = sphi 0, %s37
    %s57 = sphi 0, %s57
    %s59 = sphi 0, %s57
    %s60 = sphi 0, %s59
    %s74 = sphi 0, %s60
    %s78 = sphi 0, %s78
    %s80 = sphi 0, %s78
    %s81 = sphi 0, %s80
    %s95 = sphi 0, %s81
    %s103 = sphi 0, %s105
    %s106 = sphi 0, %s103
    %s107 = sphi 0, %s106
    %s123 = sphi 0, %s107
  $region4: #{factorized_reduce.3} parent=0 // loop_header_branch
    %12 = sbr.rel (%p10) target = $region8
  $region5: #{factorized_reduce.3} parent=0 // loop_body
    %s14 = ssub.s32 %s9, 1
    %s15 = ssub.s32 %s9, 2
    %s22 = sadd.s32 1, %s17
    %p23 = scmp.ge.s32.totalorder %s22, 1
    %s24 = scalar_select %p23, 0, %s22
    %s25 = sadd.s32 1, %s16
    %s26 = scalar_select %p23, %s25, %s16
    %p27 = scmp.ge.s32.totalorder %s26, 2
    %s28 = scalar_select %p27, 0, %s26
    %s29 = ssub.s32 %s16, %s28
    %s30 = ssub.s32 %s17, %s24
    %s31 = sor.u32 %s29, %s30
    %p32 = scmp.eq.s32.totalorder %s31, 0
    %s34 = sadd.s32 %s33, 1
    %s35 = scalar_select %p32, %s33, %s34
    %p38 = pneg %p32
    %p39 = scmp.eq.s32.totalorder %s9, 1
    %p40 = por %p38, %p39
    %p41 = scmp.ne.s32.totalorder %s33, %s36
    %p42 = scmp.eq.s32.totalorder %s9, 0
    %p43 = por %p41, %p42
    %p44 = scmp.ne.s32.totalorder %s33, %s36
    %p45 = scmp.eq.s32.totalorder %s14, 1
    %p46 = por %p44, %p45
    %p47 = scmp.ne.s32.totalorder %s36, %s37
    %p48 = scmp.eq.s32.totalorder %s14, 0
    %p49 = por %p47, %p48
    %p50 = scmp.ne.s32.totalorder %s36, %s37
    %p51 = scmp.eq.s32.totalorder %s15, 1
    %p52 = por %p50, %p51
    %p54 = scmp.ne.s32.totalorder %s37, %s53
    %p55 = scmp.eq.s32.totalorder %s15, 0
    %p56 = por %p54, %p55
    %s58 = sadd.s32 %s57, 1
    %p61 = scmp.eq.s32.totalorder %s9, 1
    %p62 = scmp.ne.s32.totalorder %s57, %s59
    %p63 = scmp.eq.s32.totalorder %s9, 0
    %p64 = por %p62, %p63
    %p65 = scmp.ne.s32.totalorder %s57, %s59
    %p66 = scmp.eq.s32.totalorder %s14, 1
    %p67 = por %p65, %p66
    %p68 = scmp.ne.s32.totalorder %s59, %s60
    %p69 = scmp.eq.s32.totalorder %s14, 0
    %p70 = por %p68, %p69
    %p71 = scmp.ne.s32.totalorder %s59, %s60
    %p72 = scmp.eq.s32.totalorder %s15, 1
    %p73 = por %p71, %p72
    %p75 = scmp.ne.s32.totalorder %s60, %s74
    %p76 = scmp.eq.s32.totalorder %s15, 0
    %p77 = por %p75, %p76
    %s79 = sadd.s32 %s78, 1
    %p82 = scmp.eq.s32.totalorder %s9, 1
    %p83 = scmp.ne.s32.totalorder %s78, %s80
    %p84 = scmp.eq.s32.totalorder %s9, 0
    %p85 = por %p83, %p84
    %p86 = scmp.ne.s32.totalorder %s78, %s80
    %p87 = scmp.eq.s32.totalorder %s14, 1
    %p88 = por %p86, %p87
    %p89 = scmp.ne.s32.totalorder %s80, %s81
    %p90 = scmp.eq.s32.totalorder %s14, 0
    %p91 = por %p89, %p90
    %p92 = scmp.ne.s32.totalorder %s80, %s81
    %p93 = scmp.eq.s32.totalorder %s15, 1
    %p94 = por %p92, %p93
    %p96 = scmp.ne.s32.totalorder %s81, %s95
    %p97 = scmp.eq.s32.totalorder %s15, 0
    %p98 = por %p96, %p97
    %s99 = ssub.s32 %s16, %s28
    %s100 = ssub.s32 %s17, %s24
    %s101 = sor.u32 %s99, %s100
    %p102 = scmp.eq.s32.totalorder %s101, 0
    %s104 = sadd.s32 %s103, 1
    %s105 = scalar_select %p102, %s103, %s104
    %p108 = pneg %p102
    %p109 = scmp.eq.s32.totalorder %s9, 1
    %p110 = por %p108, %p109
    %p111 = scmp.ne.s32.totalorder %s103, %s106
    %p112 = scmp.eq.s32.totalorder %s9, 0
    %p113 = por %p111, %p112
    %p114 = scmp.ne.s32.totalorder %s103, %s106
    %p115 = scmp.eq.s32.totalorder %s14, 1
    %p116 = por %p114, %p115
    %p117 = scmp.ne.s32.totalorder %s106, %s107
    %p118 = scmp.eq.s32.totalorder %s14, 0
    %p119 = por %p117, %p118
    %p120 = scmp.ne.s32.totalorder %s106, %s107
    %p121 = scmp.eq.s32.totalorder %s15, 1
    %p122 = por %p120, %p121
    %p124 = scmp.ne.s32.totalorder %s107, %s123
    %p125 = scmp.eq.s32.totalorder %s15, 0
    %p126 = por %p124, %p125
    %p127 = scmp.le.s32.totalorder 1, %s9
    %p128 = scmp.lt.s32.totalorder %s9, 3
    %p129 = pnand %p127, %p128
    %p130 = pneg %p129
    // Predicated region
    $region9: #{factorized_reduce.3} parent=5 // pred_check
      _
    $region10: #{factorized_reduce.3} parent=5 // pred_check_branch
      %132 = sbr.rel (%p129) target = $region12
    $region11: #{factorized_reduce.3} parent=5 // pred_region
      %s133 = ssub.s32 %s9, 1
      // Predicated region
      $region13: #{factorized_reduce.3} parent=11 // pred_check
        %p134 = pneg %p70
      $region14: #{factorized_reduce.3} parent=11 // pred_check_branch
        %136 = sbr.rel (%p134) target = $region16
      $region15: #{factorized_reduce.3} parent=11 // pred_region
        _
      $region16: #{factorized_reduce.3} parent=11 // pred_fallthru
        _
      // Predicated region
      $region17: #{factorized_reduce.3} parent=11 // pred_check
        %p137 = pneg %p91
      $region18: #{factorized_reduce.3} parent=11 // pred_check_branch
        %139 = sbr.rel (%p137) target = $region20
      $region19: #{factorized_reduce.3} parent=11 // pred_region
        _
      $region20: #{factorized_reduce.3} parent=11 // pred_fallthru
        _
    $region12: #{factorized_reduce.3} parent=5 // pred_fallthru
      _
    %p140 = scmp.lt.s32.totalorder %s9, 2
    // Predicated region
    $region21: #{factorized_reduce.3} parent=5 // pred_check
      %p141 = pneg %p140
    $region22: #{factorized_reduce.3} parent=5 // pred_check_branch
      %143 = sbr.rel (%p141) target = $region24
    $region23: #{factorized_reduce.3} parent=5 // pred_region
      // Predicated region
      $region25: #{factorized_reduce.3} parent=23 // pred_check
        %p144 = pneg %p43
      $region26: #{factorized_reduce.3} parent=23 // pred_check_branch
        %146 = sbr.rel (%p144) target = $region28
      $region27: #{factorized_reduce.3} parent=23 // pred_region
        %p147 = scmp.lt.s32.totalorder %s16, 1
        %s148 = scalar_select %p147, %s16, 1
        %p149 = scmp.lt.s32.totalorder %s17, 0
        %s150 = scalar_select %p149, %s17, 0
        %s151 = sadd.s32 %s150, %s148
        %s152 = smul.addr %s151, 8
        %s153 = scalar_lea.vmem %s0, %s152
      $region28: #{factorized_reduce.3} parent=23 // pred_fallthru
        _
    $region24: #{factorized_reduce.3} parent=5 // pred_fallthru
      _
    %p154 = scmp.le.s32.totalorder 1, %s9
    %p155 = scmp.lt.s32.totalorder %s9, 3
    %p156 = pnand %p154, %p155
    %p157 = pneg %p156
    // Predicated region
    $region29: #{factorized_reduce.3} parent=5 // pred_check
      _
    $region30: #{factorized_reduce.3} parent=5 // pred_check_branch
      %159 = sbr.rel (%p156) target = $region32
    $region31: #{factorized_reduce.3} parent=5 // pred_region
      %s160 = ssub.s32 %s9, 1
      %p161 = scmp.lt.s32.totalorder %s18, 1
      %s162 = scalar_select %p161, %s18, 1
      %p163 = scmp.lt.s32.totalorder %s19, 0
      %s164 = scalar_select %p163, %s19, 0
      %s165 = sadd.s32 %s164, %s162
      %s166 = smul.addr %s165, 8
      %s167 = scalar_lea.vmem %s0, %s166
      %p168 = pneg %p49
      %p169 = pneg %p46
      %p170 = pneg %p70
      %p171 = pneg %p67
      %p172 = pneg %p91
      %p173 = pneg %p88
      %p174 = pneg %p119
      %p175 = pneg %p116
      %p176 = scmp.lt.s32.totalorder %s18, 1
      %s177 = scalar_select %p176, %s18, 1
      %p178 = scmp.lt.s32.totalorder %s19, 0
      %s179 = scalar_select %p178, %s19, 0
      %s180 = sadd.s32 %s179, %s177
      %s181 = smul.addr %s180, 8
      %s182 = scalar_lea.vmem %s3, %s181
      %p183 = scmp.lt.s32.totalorder %s18, 1
      %s184 = scalar_select %p183, %s18, 1
      %p185 = scmp.lt.s32.totalorder %s19, 0
      %s186 = scalar_select %p185, %s19, 0
      %s187 = sadd.s32 %s186, %s184
      %s188 = smul.addr %s187, 8
      %s189 = scalar_lea.vmem %s0, %s188
      %p190 = scmp.lt.s32.totalorder %s18, 1
      %s191 = scalar_select %p190, %s18, 1
      %p192 = scmp.lt.s32.totalorder %s19, 0
      %s193 = scalar_select %p192, %s19, 0
      %s194 = sadd.s32 %s193, %s191
      %s195 = smul.addr %s194, 8
      %s196 = scalar_lea.vmem %s3, %s195
      %v197 = vld [vmem:[%s189] sm:$0xff]
      %v198 = vmax.f32 %v197, 0.0
      %v199 = vld [vmem:[%s1] sm:$0xff]
      %v200 = vld [vmem:[%s2] sm:$0xff]
      %202 = vset.pattern.permute.xlu0 0
      %203 = vperm.xlu0 %202, %v200
      %v204 = vpop.permute.xlu0 %203
      %vm206 = vcmask 64512
      %v208 = vsel %vm206, %v199, 0
      %210 = vmatprep.subr.mxu0 0.0
      %211 = vmatpush1.msra.mxu0 0.0
      %212 = vmatprep.subr.mxu0 0.0
      %213 = vmatpush1.msra.mxu0 0.0
      %214 = vmatprep.subr.mxu0 0.0
      %215 = vmatpush1.msra.mxu0 0.0
      %216 = vmatprep.subr.mxu0 0.0
      %217 = vmatpush1.msra.mxu0 0.0
      %218 = vmatprep.subr.mxu0 0.0
      %219 = vmatpush1.msra.mxu0 0.0
      %220 = vmatprep.subr.mxu0 0.0
      %221 = vmatpush1.msra.mxu0 0.0
      %222 = vmatprep.subr.mxu0 0.0
      %223 = vmatpush1.msra.mxu0 0.0
      %224 = vmatprep.subr.mxu0 0.0
      %225 = vmatpush1.msra.mxu0 0.0
      %226 = vmatprep.subr.mxu0 0.0
      %227 = vmatpush1.msra.mxu0 0.0
      %228 = vmatprep.subr.mxu0 0.0
      %229 = vmatpush1.msra.mxu0 0.0
      %230 = vmatprep.subr.mxu0 0.0
      %231 = vmatpush1.msra.mxu0 0.0
      %232 = vmatprep.subr.mxu0 0.0
      %233 = vmatpush1.msra.mxu0 0.0
      %234 = vmatprep.subr.mxu0 0.0
      %235 = vmatpush1.msra.mxu0 0.0
      %236 = vmatprep.subr.mxu0 0.0
      %237 = vmatpush1.msra.mxu0 0.0
      %238 = vmatprep.subr.mxu0 0.0
      %239 = vmatpush1.msra.mxu0 0.0
      %240 = vmatprep.subr.mxu0 0.0
      %241 = vmatpush1.msra.mxu0 %v198
      %242 = vmatprep.subr.mxu0 0.0
      %243 = vmatpush2.msra.mxu0 0.0
      %244 = vmatprep.subr.mxu0 0.0
      %245 = vmatpush2.msra.mxu0 0.0
      %246 = vmatprep.subr.mxu0 0.0
      %247 = vmatpush2.msra.mxu0 0.0
      %248 = vmatprep.subr.mxu0 0.0
      %249 = vmatpush2.msra.mxu0 0.0
      %250 = vmatprep.subr.mxu0 0.0
      %251 = vmatpush2.msra.mxu0 0.0
      %252 = vmatprep.subr.mxu0 0.0
      %253 = vmatpush2.msra.mxu0 0.0
      %254 = vmatprep.subr.mxu0 0.0
      %255 = vmatpush2.msra.mxu0 0.0
      %256 = vmatprep.subr.mxu0 0.0
      %257 = vmatpush2.msra.mxu0 0.0
      %258 = vmatprep.subr.mxu0 0.0
      %259 = vmatpush2.msra.mxu0 0.0
      %260 = vmatprep.subr.mxu0 0.0
      %261 = vmatpush2.msra.mxu0 0.0
      %262 = vmatprep.subr.mxu0 0.0
      %263 = vmatpush2.msra.mxu0 0.0
      %264 = vmatprep.subr.mxu0 0.0
      %265 = vmatpush2.msra.mxu0 0.0
      %266 = vmatprep.subr.mxu0 0.0
      %267 = vmatpush2.msra.mxu0 0.0
      %268 = vmatprep.subr.mxu0 0.0
      %269 = vmatpush2.msra.mxu0 0.0
      %270 = vmatprep.subr.mxu0 0.0
      %271 = vmatpush2.msra.mxu0 0.0
      %272 = vmatprep.subr.mxu0 0.0
      %273 = vmatpush2.msra.mxu0 0.0
      %274 = vmatprep.mubr.f32.mxu0 0.0
      %275 = vmatmul.mubr.f32.gmra.mxu0 %v208
      %v276 = vpop.f32.mrf.mxu0
      %v277 = vadd.f32 %v204, %v276
      %v278 = vpop.f32.mrf.mxu0
      %279 = vdwg.mxu0
      %vm280 = vcmask 523264
      %281 = vst.msk [vmem:[%s196] sm:$0xff] %vm280, %v277
      %p282 = scmp.lt.s32.totalorder %s18, 1
      %s283 = scalar_select %p282, %s18, 1
      %p284 = scmp.lt.s32.totalorder %s19, 0
      %s285 = scalar_select %p284, %s19, 0
      %s286 = sadd.s32 %s285, %s283
      %s287 = smul.addr %s286, 8
      %s288 = scalar_lea.vmem %s3, %s287
      // Predicated region
      $region33: #{factorized_reduce.3} parent=31 // pred_check
        %p289 = pneg %p116
      $region34: #{factorized_reduce.3} parent=31 // pred_check_branch
        %291 = sbr.rel (%p289) target = $region36
      $region35: #{factorized_reduce.3} parent=31 // pred_region
        _
      $region36: #{factorized_reduce.3} parent=31 // pred_fallthru
        _
    $region32: #{factorized_reduce.3} parent=5 // pred_fallthru
      _
    %p292 = scmp.le.s32.totalorder 2, %s9
    // Predicated region
    $region37: #{factorized_reduce.3} parent=5 // pred_check
      %p293 = pneg %p292
    $region38: #{factorized_reduce.3} parent=5 // pred_check_branch
      %295 = sbr.rel (%p293) target = $region40
    $region39: #{factorized_reduce.3} parent=5 // pred_region
      %s296 = ssub.s32 %s9, 2
      // Predicated region
      $region41: #{factorized_reduce.3} parent=39 // pred_check
        %p297 = pneg %p122
      $region42: #{factorized_reduce.3} parent=39 // pred_check_branch
        %299 = sbr.rel (%p297) target = $region44
      $region43: #{factorized_reduce.3} parent=39 // pred_region
        %p300 = scmp.lt.s32.totalorder %s20, 1
        %s301 = scalar_select %p300, %s20, 1
        %p302 = scmp.lt.s32.totalorder %s21, 0
        %s303 = scalar_select %p302, %s21, 0
        %s304 = sadd.s32 %s303, %s301
        %s305 = smul.addr %s304, 8
        %s306 = scalar_lea.vmem %s3, %s305
      $region44: #{factorized_reduce.3} parent=39 // pred_fallthru
        _
    $region40: #{factorized_reduce.3} parent=5 // pred_fallthru
      _
  $region6: #{factorized_reduce.3} parent=0 // loop_footer
    %s13 = sadd.s32 1, %s9
  $region7: #{factorized_reduce.3} parent=0 // loop_footer_branch
    %8 = sbr.rel target = $region3
  $region8: #{factorized_reduce.3} parent=0 // loop_exit
    _

</llo_original>
